<compile_context>
chip_gen: v6e
topology: v6e:2x2x1
jax: 0.10.0
libtpu: 0.0.40
codegen_flags: <defaults>
</compile_context>

<pallas_src>
import jax
import jax.numpy as jnp
from jax.experimental import pallas as pl
from jax.experimental.pallas import tpu as pltpu

F = 5        # Linear(in=5, out=5)
SUB = 8      # sublane-padded batch dim
LANE = 128   # lane-padded feature dim

# Rows of the packed bias block (constants tile index 2).
_B1P1, _B1P2, _B1, _B2P1, _B2 = 0, 1, 2, 3, 4


def _recurrent_kernel(x_ref, c_ref, o_ref):
    # x_ref : (SUB, LANE)      zero-padded input, valid region [:F, :F]
    # c_ref : (3, SUB, LANE)   [0] = W1^T rows, [1] = (2*W2)^T rows, [2] = 5 folded bias rows
    # o_ref : (SUB, LANE)
    w1_tile = c_ref[0]
    w2_tile = c_ref[1]
    b_tile = c_ref[2]

    # Hoist every sublane broadcast out of the layer chain: these depend only on the constants,
    # so they are done once per kernel invocation and can be front-loaded by the scheduler.
    w1r = [jnp.broadcast_to(w1_tile[k:k + 1, :], (SUB, LANE)) for k in range(F)]
    w2r = [jnp.broadcast_to(w2_tile[k:k + 1, :], (SUB, LANE)) for k in range(F)]
    bias = [jnp.broadcast_to(b_tile[r:r + 1, :], (SUB, LANE)) for r in range(F)]

    def fc(v, w_rows, b):
        # y[i, j] = sum_k v[i, k] * W^T[k, j] + b[j]; contraction width is only F=5, so five
        # VPU broadcast-MACs (lane-broadcast of column k of v against a precomputed weight-row
        # tile) beat a padded MXU matmul on this purely serial 10-layer chain.
        t = [v[:, k:k + 1] * w_rows[k] for k in range(F)]
        # Balanced add tree: dependent-add depth 3 instead of 6 (no f32 FMA on the VPU).
        return (b + t[4]) + ((t[0] + t[1]) + (t[2] + t[3]))

    x = x_ref[...]
    # Forward chain of the PyTorch module; all +1 / *2 / +ones glue is folded into the constants.
    x = fc(x, w1r, bias[_B1P1])   # fc1(x); x + 1
    x = fc(x, w2r, bias[_B2P1])   # fc2(x); x*2 + ones
    x = fc(x, w2r, bias[_B2P1])   # fc2(x); x*2 + ones
    x = fc(x, w1r, bias[_B1P1])   # fc1(x); x + 1
    x = fc(x, w2r, bias[_B2P1])   # fc2(x); x*2 + ones
    x = fc(x, w2r, bias[_B2])     # fc2(x); x*2
    x = fc(x, w1r, bias[_B1P2])   # fc1(x); x + 1 + ones
    x = fc(x, w2r, bias[_B2])     # fc2(x); x*2
    x = fc(x, w2r, bias[_B2])     # fc2(x); x*2
    x = fc(x, w1r, bias[_B1])     # fc1(x)
    o_ref[...] = x


def _prep_constants(w1, b1, w2, b2):
    """One-time prep: fold glue into weights/biases and pack into a single (3,8,128) tile set."""
    w1 = jnp.asarray(w1, jnp.float32)
    b1 = jnp.asarray(b1, jnp.float32)
    w2 = jnp.asarray(w2, jnp.float32)
    b2 = jnp.asarray(b2, jnp.float32)

    c = jnp.zeros((3, SUB, LANE), jnp.float32)
    c = c.at[0, :F, :F].set(w1.T)            # W1^T rows
    c = c.at[1, :F, :F].set(2.0 * w2.T)      # fold the trailing *2 into W2 (exact: power of two)
    bias_rows = jnp.stack([
        b1 + 1.0,        # _B1P1 : fc1 ; +1
        b1 + 2.0,        # _B1P2 : fc1 ; +1 + ones
        b1,              # _B1   : fc1 (bare, last layer)
        2.0 * b2 + 1.0,  # _B2P1 : fc2 ; *2 + ones
        2.0 * b2,        # _B2   : fc2 ; *2
    ])
    c = c.at[2, :F, :F].set(bias_rows)
    return c


def make_recurrent_nested_internal(w1, b1, w2, b2):
    """Builds a jitted callable x -> forward(x). Parameter prep runs once, here, not per call."""
    consts = _prep_constants(w1, b1, w2, b2)   # eager, cached; the only per-call work is padding x

    call = pl.pallas_call(
        _recurrent_kernel,
        out_shape=jax.ShapeDtypeStruct((SUB, LANE), jnp.float32),
        in_specs=[
            pl.BlockSpec(memory_space=pltpu.MemorySpace.VMEM),   # padded x   (one (8,128) tile)
            pl.BlockSpec(memory_space=pltpu.MemorySpace.VMEM),   # packed constants (one DMA)
        ],
        out_specs=pl.BlockSpec(memory_space=pltpu.MemorySpace.VMEM),
    )

    @jax.jit
    def run(x):
        b, fin = x.shape
        xp = jnp.zeros((SUB, LANE), jnp.float32).at[:b, :fin].set(
            jnp.asarray(x, jnp.float32))
        out = call(xp, consts)
        return out[:b, :fin]

    return run


def _reference(x, w1, b1, w2, b2):
    """Pure-JAX mirror of the PyTorch forward (un-fused, un-folded)."""
    hp = jax.lax.Precision.HIGHEST
    ones = jnp.ones((F, F), jnp.float32)
    fc1 = lambda v: jnp.dot(v, w1.T, precision=hp) + b1
    fc2 = lambda v: jnp.dot(v, w2.T, precision=hp) + b2
    x = fc1(x); x = x + 1
    x = fc2(x); x = x * 2 + ones
    x = fc2(x); x = x * 2 + ones
    x = fc1(x); x = x + 1
    x = fc2(x); x = x * 2 + ones
    x = fc2(x); x = x * 2
    x = fc1(x); x = x + 1 + ones
    x = fc2(x); x = x * 2
    x = fc2(x); x = x * 2
    x = fc1(x)
    return x


if __name__ == "__main__":
    key = jax.random.PRNGKey(0)
    kx, kw1, kb1, kw2, kb2 = jax.random.split(key, 5)

    # forward adds torch.ones(5, 5), so the input is (5, 5)
    x = jax.random.normal(kx, (F, F), dtype=jnp.float32)

    # PyTorch nn.Linear init: uniform in [-1/sqrt(in_features), 1/sqrt(in_features)]
    bound = 1.0 / jnp.sqrt(jnp.float32(F))
    w1 = jax.random.uniform(kw1, (F, F), jnp.float32, -bound, bound)
    b1 = jax.random.uniform(kb1, (F,), jnp.float32, -bound, bound)
    w2 = jax.random.uniform(kw2, (F, F), jnp.float32, -bound, bound)
    b2 = jax.random.uniform(kb2, (F,), jnp.float32, -bound, bound)

    fwd = make_recurrent_nested_internal(w1, b1, w2, b2)   # prep happens once here
    out = fwd(x)
    out = jax.block_until_ready(out)

    ref = _reference(x, w1, b1, w2, b2)
    assert out.shape == (F, F)
    assert jnp.allclose(out, ref, atol=1e-4, rtol=1e-4), float(jnp.max(jnp.abs(out - ref)))
    print("KERNEL_OK")
</pallas_src>

<mosaic_0001>
module attributes {stable_mosaic.version = 11 : i64} {
  func.func @_recurrent_kernel(%arg0: memref<8x128xf32, #tpu.memory_space<vmem>>, %arg1: memref<3x8x128xf32, #tpu.memory_space<vmem>>, %arg2: memref<8x128xf32, #tpu.memory_space<vmem>>) attributes {dimension_semantics = [], scalar_prefetch = 0 : i64, scratch_operands = 0 : i64, tpu.core_type = #tpu.core_type<tc>} {
    %c0 = arith.constant 0 : index
    %c0_0 = arith.constant 0 : index
    %c0_1 = arith.constant 0 : index
    %0 = vector.load %arg1[%c0, %c0_0, %c0_1] : memref<3x8x128xf32, #tpu.memory_space<vmem>>, vector<1x8x128xf32>
    %1 = vector.shape_cast %0 : vector<1x8x128xf32> to vector<8x128xf32>
    %c1 = arith.constant 1 : index
    %c0_2 = arith.constant 0 : index
    %c0_3 = arith.constant 0 : index
    %2 = vector.load %arg1[%c1, %c0_2, %c0_3] : memref<3x8x128xf32, #tpu.memory_space<vmem>>, vector<1x8x128xf32>
    %3 = vector.shape_cast %2 : vector<1x8x128xf32> to vector<8x128xf32>
    %c2 = arith.constant 2 : index
    %c0_4 = arith.constant 0 : index
    %c0_5 = arith.constant 0 : index
    %4 = vector.load %arg1[%c2, %c0_4, %c0_5] : memref<3x8x128xf32, #tpu.memory_space<vmem>>, vector<1x8x128xf32>
    %5 = vector.shape_cast %4 : vector<1x8x128xf32> to vector<8x128xf32>
    %6 = vector.extract_strided_slice %1 {offsets = [0, 0], sizes = [1, 128], strides = [1, 1]} : vector<8x128xf32> to vector<1x128xf32>
    %7 = vector.shape_cast %6 : vector<1x128xf32> to vector<1x128xf32>
    %8 = vector.broadcast %7 : vector<1x128xf32> to vector<8x128xf32>
    %9 = vector.extract_strided_slice %1 {offsets = [1, 0], sizes = [1, 128], strides = [1, 1]} : vector<8x128xf32> to vector<1x128xf32>
    %10 = vector.shape_cast %9 : vector<1x128xf32> to vector<1x128xf32>
    %11 = vector.broadcast %10 : vector<1x128xf32> to vector<8x128xf32>
    %12 = vector.extract_strided_slice %1 {offsets = [2, 0], sizes = [1, 128], strides = [1, 1]} : vector<8x128xf32> to vector<1x128xf32>
    %13 = vector.shape_cast %12 : vector<1x128xf32> to vector<1x128xf32>
    %14 = vector.broadcast %13 : vector<1x128xf32> to vector<8x128xf32>
    %15 = vector.extract_strided_slice %1 {offsets = [3, 0], sizes = [1, 128], strides = [1, 1]} : vector<8x128xf32> to vector<1x128xf32>
    %16 = vector.shape_cast %15 : vector<1x128xf32> to vector<1x128xf32>
    %17 = vector.broadcast %16 : vector<1x128xf32> to vector<8x128xf32>
    %18 = vector.extract_strided_slice %1 {offsets = [4, 0], sizes = [1, 128], strides = [1, 1]} : vector<8x128xf32> to vector<1x128xf32>
    %19 = vector.shape_cast %18 : vector<1x128xf32> to vector<1x128xf32>
    %20 = vector.broadcast %19 : vector<1x128xf32> to vector<8x128xf32>
    %21 = vector.extract_strided_slice %3 {offsets = [0, 0], sizes = [1, 128], strides = [1, 1]} : vector<8x128xf32> to vector<1x128xf32>
    %22 = vector.shape_cast %21 : vector<1x128xf32> to vector<1x128xf32>
    %23 = vector.broadcast %22 : vector<1x128xf32> to vector<8x128xf32>
    %24 = vector.extract_strided_slice %3 {offsets = [1, 0], sizes = [1, 128], strides = [1, 1]} : vector<8x128xf32> to vector<1x128xf32>
    %25 = vector.shape_cast %24 : vector<1x128xf32> to vector<1x128xf32>
    %26 = vector.broadcast %25 : vector<1x128xf32> to vector<8x128xf32>
    %27 = vector.extract_strided_slice %3 {offsets = [2, 0], sizes = [1, 128], strides = [1, 1]} : vector<8x128xf32> to vector<1x128xf32>
    %28 = vector.shape_cast %27 : vector<1x128xf32> to vector<1x128xf32>
    %29 = vector.broadcast %28 : vector<1x128xf32> to vector<8x128xf32>
    %30 = vector.extract_strided_slice %3 {offsets = [3, 0], sizes = [1, 128], strides = [1, 1]} : vector<8x128xf32> to vector<1x128xf32>
    %31 = vector.shape_cast %30 : vector<1x128xf32> to vector<1x128xf32>
    %32 = vector.broadcast %31 : vector<1x128xf32> to vector<8x128xf32>
    %33 = vector.extract_strided_slice %3 {offsets = [4, 0], sizes = [1, 128], strides = [1, 1]} : vector<8x128xf32> to vector<1x128xf32>
    %34 = vector.shape_cast %33 : vector<1x128xf32> to vector<1x128xf32>
    %35 = vector.broadcast %34 : vector<1x128xf32> to vector<8x128xf32>
    %36 = vector.extract_strided_slice %5 {offsets = [0, 0], sizes = [1, 128], strides = [1, 1]} : vector<8x128xf32> to vector<1x128xf32>
    %37 = vector.shape_cast %36 : vector<1x128xf32> to vector<1x128xf32>
    %38 = vector.broadcast %37 : vector<1x128xf32> to vector<8x128xf32>
    %39 = vector.extract_strided_slice %5 {offsets = [1, 0], sizes = [1, 128], strides = [1, 1]} : vector<8x128xf32> to vector<1x128xf32>
    %40 = vector.shape_cast %39 : vector<1x128xf32> to vector<1x128xf32>
    %41 = vector.broadcast %40 : vector<1x128xf32> to vector<8x128xf32>
    %42 = vector.extract_strided_slice %5 {offsets = [2, 0], sizes = [1, 128], strides = [1, 1]} : vector<8x128xf32> to vector<1x128xf32>
    %43 = vector.shape_cast %42 : vector<1x128xf32> to vector<1x128xf32>
    %44 = vector.broadcast %43 : vector<1x128xf32> to vector<8x128xf32>
    %45 = vector.extract_strided_slice %5 {offsets = [3, 0], sizes = [1, 128], strides = [1, 1]} : vector<8x128xf32> to vector<1x128xf32>
    %46 = vector.shape_cast %45 : vector<1x128xf32> to vector<1x128xf32>
    %47 = vector.broadcast %46 : vector<1x128xf32> to vector<8x128xf32>
    %48 = vector.extract_strided_slice %5 {offsets = [4, 0], sizes = [1, 128], strides = [1, 1]} : vector<8x128xf32> to vector<1x128xf32>
    %49 = vector.shape_cast %48 : vector<1x128xf32> to vector<1x128xf32>
    %50 = vector.broadcast %49 : vector<1x128xf32> to vector<8x128xf32>
    %c0_6 = arith.constant 0 : index
    %c0_7 = arith.constant 0 : index
    %51 = vector.load %arg0[%c0_6, %c0_7] : memref<8x128xf32, #tpu.memory_space<vmem>>, vector<8x128xf32>
    %52 = vector.extract_strided_slice %51 {offsets = [0, 0], sizes = [8, 1], strides = [1, 1]} : vector<8x128xf32> to vector<8x1xf32>
    %53 = vector.broadcast %52 : vector<8x1xf32> to vector<8x128xf32>
    %54 = arith.mulf %53, %8 : vector<8x128xf32>
    %55 = vector.extract_strided_slice %51 {offsets = [0, 1], sizes = [8, 1], strides = [1, 1]} : vector<8x128xf32> to vector<8x1xf32>
    %56 = vector.broadcast %55 : vector<8x1xf32> to vector<8x128xf32>
    %57 = arith.mulf %56, %11 : vector<8x128xf32>
    %58 = vector.extract_strided_slice %51 {offsets = [0, 2], sizes = [8, 1], strides = [1, 1]} : vector<8x128xf32> to vector<8x1xf32>
    %59 = vector.broadcast %58 : vector<8x1xf32> to vector<8x128xf32>
    %60 = arith.mulf %59, %14 : vector<8x128xf32>
    %61 = vector.extract_strided_slice %51 {offsets = [0, 3], sizes = [8, 1], strides = [1, 1]} : vector<8x128xf32> to vector<8x1xf32>
    %62 = vector.broadcast %61 : vector<8x1xf32> to vector<8x128xf32>
    %63 = arith.mulf %62, %17 : vector<8x128xf32>
    %64 = vector.extract_strided_slice %51 {offsets = [0, 4], sizes = [8, 1], strides = [1, 1]} : vector<8x128xf32> to vector<8x1xf32>
    %65 = vector.broadcast %64 : vector<8x1xf32> to vector<8x128xf32>
    %66 = arith.mulf %65, %20 : vector<8x128xf32>
    %67 = arith.addf %38, %66 : vector<8x128xf32>
    %68 = arith.addf %54, %57 : vector<8x128xf32>
    %69 = arith.addf %60, %63 : vector<8x128xf32>
    %70 = arith.addf %68, %69 : vector<8x128xf32>
    %71 = arith.addf %67, %70 : vector<8x128xf32>
    %72 = vector.extract_strided_slice %71 {offsets = [0, 0], sizes = [8, 1], strides = [1, 1]} : vector<8x128xf32> to vector<8x1xf32>
    %73 = vector.broadcast %72 : vector<8x1xf32> to vector<8x128xf32>
    %74 = arith.mulf %73, %23 : vector<8x128xf32>
    %75 = vector.extract_strided_slice %71 {offsets = [0, 1], sizes = [8, 1], strides = [1, 1]} : vector<8x128xf32> to vector<8x1xf32>
    %76 = vector.broadcast %75 : vector<8x1xf32> to vector<8x128xf32>
    %77 = arith.mulf %76, %26 : vector<8x128xf32>
    %78 = vector.extract_strided_slice %71 {offsets = [0, 2], sizes = [8, 1], strides = [1, 1]} : vector<8x128xf32> to vector<8x1xf32>
    %79 = vector.broadcast %78 : vector<8x1xf32> to vector<8x128xf32>
    %80 = arith.mulf %79, %29 : vector<8x128xf32>
    %81 = vector.extract_strided_slice %71 {offsets = [0, 3], sizes = [8, 1], strides = [1, 1]} : vector<8x128xf32> to vector<8x1xf32>
    %82 = vector.broadcast %81 : vector<8x1xf32> to vector<8x128xf32>
    %83 = arith.mulf %82, %32 : vector<8x128xf32>
    %84 = vector.extract_strided_slice %71 {offsets = [0, 4], sizes = [8, 1], strides = [1, 1]} : vector<8x128xf32> to vector<8x1xf32>
    %85 = vector.broadcast %84 : vector<8x1xf32> to vector<8x128xf32>
    %86 = arith.mulf %85, %35 : vector<8x128xf32>
    %87 = arith.addf %47, %86 : vector<8x128xf32>
    %88 = arith.addf %74, %77 : vector<8x128xf32>
    %89 = arith.addf %80, %83 : vector<8x128xf32>
    %90 = arith.addf %88, %89 : vector<8x128xf32>
    %91 = arith.addf %87, %90 : vector<8x128xf32>
    %92 = vector.extract_strided_slice %91 {offsets = [0, 0], sizes = [8, 1], strides = [1, 1]} : vector<8x128xf32> to vector<8x1xf32>
    %93 = vector.broadcast %92 : vector<8x1xf32> to vector<8x128xf32>
    %94 = arith.mulf %93, %23 : vector<8x128xf32>
    %95 = vector.extract_strided_slice %91 {offsets = [0, 1], sizes = [8, 1], strides = [1, 1]} : vector<8x128xf32> to vector<8x1xf32>
    %96 = vector.broadcast %95 : vector<8x1xf32> to vector<8x128xf32>
    %97 = arith.mulf %96, %26 : vector<8x128xf32>
    %98 = vector.extract_strided_slice %91 {offsets = [0, 2], sizes = [8, 1], strides = [1, 1]} : vector<8x128xf32> to vector<8x1xf32>
    %99 = vector.broadcast %98 : vector<8x1xf32> to vector<8x128xf32>
    %100 = arith.mulf %99, %29 : vector<8x128xf32>
    %101 = vector.extract_strided_slice %91 {offsets = [0, 3], sizes = [8, 1], strides = [1, 1]} : vector<8x128xf32> to vector<8x1xf32>
    %102 = vector.broadcast %101 : vector<8x1xf32> to vector<8x128xf32>
    %103 = arith.mulf %102, %32 : vector<8x128xf32>
    %104 = vector.extract_strided_slice %91 {offsets = [0, 4], sizes = [8, 1], strides = [1, 1]} : vector<8x128xf32> to vector<8x1xf32>
    %105 = vector.broadcast %104 : vector<8x1xf32> to vector<8x128xf32>
    %106 = arith.mulf %105, %35 : vector<8x128xf32>
    %107 = arith.addf %47, %106 : vector<8x128xf32>
    %108 = arith.addf %94, %97 : vector<8x128xf32>
    %109 = arith.addf %100, %103 : vector<8x128xf32>
    %110 = arith.addf %108, %109 : vector<8x128xf32>
    %111 = arith.addf %107, %110 : vector<8x128xf32>
    %112 = vector.extract_strided_slice %111 {offsets = [0, 0], sizes = [8, 1], strides = [1, 1]} : vector<8x128xf32> to vector<8x1xf32>
    %113 = vector.broadcast %112 : vector<8x1xf32> to vector<8x128xf32>
    %114 = arith.mulf %113, %8 : vector<8x128xf32>
    %115 = vector.extract_strided_slice %111 {offsets = [0, 1], sizes = [8, 1], strides = [1, 1]} : vector<8x128xf32> to vector<8x1xf32>
    %116 = vector.broadcast %115 : vector<8x1xf32> to vector<8x128xf32>
    %117 = arith.mulf %116, %11 : vector<8x128xf32>
    %118 = vector.extract_strided_slice %111 {offsets = [0, 2], sizes = [8, 1], strides = [1, 1]} : vector<8x128xf32> to vector<8x1xf32>
    %119 = vector.broadcast %118 : vector<8x1xf32> to vector<8x128xf32>
    %120 = arith.mulf %119, %14 : vector<8x128xf32>
    %121 = vector.extract_strided_slice %111 {offsets = [0, 3], sizes = [8, 1], strides = [1, 1]} : vector<8x128xf32> to vector<8x1xf32>
    %122 = vector.broadcast %121 : vector<8x1xf32> to vector<8x128xf32>
    %123 = arith.mulf %122, %17 : vector<8x128xf32>
    %124 = vector.extract_strided_slice %111 {offsets = [0, 4], sizes = [8, 1], strides = [1, 1]} : vector<8x128xf32> to vector<8x1xf32>
    %125 = vector.broadcast %124 : vector<8x1xf32> to vector<8x128xf32>
    %126 = arith.mulf %125, %20 : vector<8x128xf32>
    %127 = arith.addf %38, %126 : vector<8x128xf32>
    %128 = arith.addf %114, %117 : vector<8x128xf32>
    %129 = arith.addf %120, %123 : vector<8x128xf32>
    %130 = arith.addf %128, %129 : vector<8x128xf32>
    %131 = arith.addf %127, %130 : vector<8x128xf32>
    %132 = vector.extract_strided_slice %131 {offsets = [0, 0], sizes = [8, 1], strides = [1, 1]} : vector<8x128xf32> to vector<8x1xf32>
    %133 = vector.broadcast %132 : vector<8x1xf32> to vector<8x128xf32>
    %134 = arith.mulf %133, %23 : vector<8x128xf32>
    %135 = vector.extract_strided_slice %131 {offsets = [0, 1], sizes = [8, 1], strides = [1, 1]} : vector<8x128xf32> to vector<8x1xf32>
    %136 = vector.broadcast %135 : vector<8x1xf32> to vector<8x128xf32>
    %137 = arith.mulf %136, %26 : vector<8x128xf32>
    %138 = vector.extract_strided_slice %131 {offsets = [0, 2], sizes = [8, 1], strides = [1, 1]} : vector<8x128xf32> to vector<8x1xf32>
    %139 = vector.broadcast %138 : vector<8x1xf32> to vector<8x128xf32>
    %140 = arith.mulf %139, %29 : vector<8x128xf32>
    %141 = vector.extract_strided_slice %131 {offsets = [0, 3], sizes = [8, 1], strides = [1, 1]} : vector<8x128xf32> to vector<8x1xf32>
    %142 = vector.broadcast %141 : vector<8x1xf32> to vector<8x128xf32>
    %143 = arith.mulf %142, %32 : vector<8x128xf32>
    %144 = vector.extract_strided_slice %131 {offsets = [0, 4], sizes = [8, 1], strides = [1, 1]} : vector<8x128xf32> to vector<8x1xf32>
    %145 = vector.broadcast %144 : vector<8x1xf32> to vector<8x128xf32>
    %146 = arith.mulf %145, %35 : vector<8x128xf32>
    %147 = arith.addf %47, %146 : vector<8x128xf32>
    %148 = arith.addf %134, %137 : vector<8x128xf32>
    %149 = arith.addf %140, %143 : vector<8x128xf32>
    %150 = arith.addf %148, %149 : vector<8x128xf32>
    %151 = arith.addf %147, %150 : vector<8x128xf32>
    %152 = vector.extract_strided_slice %151 {offsets = [0, 0], sizes = [8, 1], strides = [1, 1]} : vector<8x128xf32> to vector<8x1xf32>
    %153 = vector.broadcast %152 : vector<8x1xf32> to vector<8x128xf32>
    %154 = arith.mulf %153, %23 : vector<8x128xf32>
    %155 = vector.extract_strided_slice %151 {offsets = [0, 1], sizes = [8, 1], strides = [1, 1]} : vector<8x128xf32> to vector<8x1xf32>
    %156 = vector.broadcast %155 : vector<8x1xf32> to vector<8x128xf32>
    %157 = arith.mulf %156, %26 : vector<8x128xf32>
    %158 = vector.extract_strided_slice %151 {offsets = [0, 2], sizes = [8, 1], strides = [1, 1]} : vector<8x128xf32> to vector<8x1xf32>
    %159 = vector.broadcast %158 : vector<8x1xf32> to vector<8x128xf32>
    %160 = arith.mulf %159, %29 : vector<8x128xf32>
    %161 = vector.extract_strided_slice %151 {offsets = [0, 3], sizes = [8, 1], strides = [1, 1]} : vector<8x128xf32> to vector<8x1xf32>
    %162 = vector.broadcast %161 : vector<8x1xf32> to vector<8x128xf32>
    %163 = arith.mulf %162, %32 : vector<8x128xf32>
    %164 = vector.extract_strided_slice %151 {offsets = [0, 4], sizes = [8, 1], strides = [1, 1]} : vector<8x128xf32> to vector<8x1xf32>
    %165 = vector.broadcast %164 : vector<8x1xf32> to vector<8x128xf32>
    %166 = arith.mulf %165, %35 : vector<8x128xf32>
    %167 = arith.addf %50, %166 : vector<8x128xf32>
    %168 = arith.addf %154, %157 : vector<8x128xf32>
    %169 = arith.addf %160, %163 : vector<8x128xf32>
    %170 = arith.addf %168, %169 : vector<8x128xf32>
    %171 = arith.addf %167, %170 : vector<8x128xf32>
    %172 = vector.extract_strided_slice %171 {offsets = [0, 0], sizes = [8, 1], strides = [1, 1]} : vector<8x128xf32> to vector<8x1xf32>
    %173 = vector.broadcast %172 : vector<8x1xf32> to vector<8x128xf32>
    %174 = arith.mulf %173, %8 : vector<8x128xf32>
    %175 = vector.extract_strided_slice %171 {offsets = [0, 1], sizes = [8, 1], strides = [1, 1]} : vector<8x128xf32> to vector<8x1xf32>
    %176 = vector.broadcast %175 : vector<8x1xf32> to vector<8x128xf32>
    %177 = arith.mulf %176, %11 : vector<8x128xf32>
    %178 = vector.extract_strided_slice %171 {offsets = [0, 2], sizes = [8, 1], strides = [1, 1]} : vector<8x128xf32> to vector<8x1xf32>
    %179 = vector.broadcast %178 : vector<8x1xf32> to vector<8x128xf32>
    %180 = arith.mulf %179, %14 : vector<8x128xf32>
    %181 = vector.extract_strided_slice %171 {offsets = [0, 3], sizes = [8, 1], strides = [1, 1]} : vector<8x128xf32> to vector<8x1xf32>
    %182 = vector.broadcast %181 : vector<8x1xf32> to vector<8x128xf32>
    %183 = arith.mulf %182, %17 : vector<8x128xf32>
    %184 = vector.extract_strided_slice %171 {offsets = [0, 4], sizes = [8, 1], strides = [1, 1]} : vector<8x128xf32> to vector<8x1xf32>
    %185 = vector.broadcast %184 : vector<8x1xf32> to vector<8x128xf32>
    %186 = arith.mulf %185, %20 : vector<8x128xf32>
    %187 = arith.addf %41, %186 : vector<8x128xf32>
    %188 = arith.addf %174, %177 : vector<8x128xf32>
    %189 = arith.addf %180, %183 : vector<8x128xf32>
    %190 = arith.addf %188, %189 : vector<8x128xf32>
    %191 = arith.addf %187, %190 : vector<8x128xf32>
    %192 = vector.extract_strided_slice %191 {offsets = [0, 0], sizes = [8, 1], strides = [1, 1]} : vector<8x128xf32> to vector<8x1xf32>
    %193 = vector.broadcast %192 : vector<8x1xf32> to vector<8x128xf32>
    %194 = arith.mulf %193, %23 : vector<8x128xf32>
    %195 = vector.extract_strided_slice %191 {offsets = [0, 1], sizes = [8, 1], strides = [1, 1]} : vector<8x128xf32> to vector<8x1xf32>
    %196 = vector.broadcast %195 : vector<8x1xf32> to vector<8x128xf32>
    %197 = arith.mulf %196, %26 : vector<8x128xf32>
    %198 = vector.extract_strided_slice %191 {offsets = [0, 2], sizes = [8, 1], strides = [1, 1]} : vector<8x128xf32> to vector<8x1xf32>
    %199 = vector.broadcast %198 : vector<8x1xf32> to vector<8x128xf32>
    %200 = arith.mulf %199, %29 : vector<8x128xf32>
    %201 = vector.extract_strided_slice %191 {offsets = [0, 3], sizes = [8, 1], strides = [1, 1]} : vector<8x128xf32> to vector<8x1xf32>
    %202 = vector.broadcast %201 : vector<8x1xf32> to vector<8x128xf32>
    %203 = arith.mulf %202, %32 : vector<8x128xf32>
    %204 = vector.extract_strided_slice %191 {offsets = [0, 4], sizes = [8, 1], strides = [1, 1]} : vector<8x128xf32> to vector<8x1xf32>
    %205 = vector.broadcast %204 : vector<8x1xf32> to vector<8x128xf32>
    %206 = arith.mulf %205, %35 : vector<8x128xf32>
    %207 = arith.addf %50, %206 : vector<8x128xf32>
    %208 = arith.addf %194, %197 : vector<8x128xf32>
    %209 = arith.addf %200, %203 : vector<8x128xf32>
    %210 = arith.addf %208, %209 : vector<8x128xf32>
    %211 = arith.addf %207, %210 : vector<8x128xf32>
    %212 = vector.extract_strided_slice %211 {offsets = [0, 0], sizes = [8, 1], strides = [1, 1]} : vector<8x128xf32> to vector<8x1xf32>
    %213 = vector.broadcast %212 : vector<8x1xf32> to vector<8x128xf32>
    %214 = arith.mulf %213, %23 : vector<8x128xf32>
    %215 = vector.extract_strided_slice %211 {offsets = [0, 1], sizes = [8, 1], strides = [1, 1]} : vector<8x128xf32> to vector<8x1xf32>
    %216 = vector.broadcast %215 : vector<8x1xf32> to vector<8x128xf32>
    %217 = arith.mulf %216, %26 : vector<8x128xf32>
    %218 = vector.extract_strided_slice %211 {offsets = [0, 2], sizes = [8, 1], strides = [1, 1]} : vector<8x128xf32> to vector<8x1xf32>
    %219 = vector.broadcast %218 : vector<8x1xf32> to vector<8x128xf32>
    %220 = arith.mulf %219, %29 : vector<8x128xf32>
    %221 = vector.extract_strided_slice %211 {offsets = [0, 3], sizes = [8, 1], strides = [1, 1]} : vector<8x128xf32> to vector<8x1xf32>
    %222 = vector.broadcast %221 : vector<8x1xf32> to vector<8x128xf32>
    %223 = arith.mulf %222, %32 : vector<8x128xf32>
    %224 = vector.extract_strided_slice %211 {offsets = [0, 4], sizes = [8, 1], strides = [1, 1]} : vector<8x128xf32> to vector<8x1xf32>
    %225 = vector.broadcast %224 : vector<8x1xf32> to vector<8x128xf32>
    %226 = arith.mulf %225, %35 : vector<8x128xf32>
    %227 = arith.addf %50, %226 : vector<8x128xf32>
    %228 = arith.addf %214, %217 : vector<8x128xf32>
    %229 = arith.addf %220, %223 : vector<8x128xf32>
    %230 = arith.addf %228, %229 : vector<8x128xf32>
    %231 = arith.addf %227, %230 : vector<8x128xf32>
    %232 = vector.extract_strided_slice %231 {offsets = [0, 0], sizes = [8, 1], strides = [1, 1]} : vector<8x128xf32> to vector<8x1xf32>
    %233 = vector.broadcast %232 : vector<8x1xf32> to vector<8x128xf32>
    %234 = arith.mulf %233, %8 : vector<8x128xf32>
    %235 = vector.extract_strided_slice %231 {offsets = [0, 1], sizes = [8, 1], strides = [1, 1]} : vector<8x128xf32> to vector<8x1xf32>
    %236 = vector.broadcast %235 : vector<8x1xf32> to vector<8x128xf32>
    %237 = arith.mulf %236, %11 : vector<8x128xf32>
    %238 = vector.extract_strided_slice %231 {offsets = [0, 2], sizes = [8, 1], strides = [1, 1]} : vector<8x128xf32> to vector<8x1xf32>
    %239 = vector.broadcast %238 : vector<8x1xf32> to vector<8x128xf32>
    %240 = arith.mulf %239, %14 : vector<8x128xf32>
    %241 = vector.extract_strided_slice %231 {offsets = [0, 3], sizes = [8, 1], strides = [1, 1]} : vector<8x128xf32> to vector<8x1xf32>
    %242 = vector.broadcast %241 : vector<8x1xf32> to vector<8x128xf32>
    %243 = arith.mulf %242, %17 : vector<8x128xf32>
    %244 = vector.extract_strided_slice %231 {offsets = [0, 4], sizes = [8, 1], strides = [1, 1]} : vector<8x128xf32> to vector<8x1xf32>
    %245 = vector.broadcast %244 : vector<8x1xf32> to vector<8x128xf32>
    %246 = arith.mulf %245, %20 : vector<8x128xf32>
    %247 = arith.addf %44, %246 : vector<8x128xf32>
    %248 = arith.addf %234, %237 : vector<8x128xf32>
    %249 = arith.addf %240, %243 : vector<8x128xf32>
    %250 = arith.addf %248, %249 : vector<8x128xf32>
    %251 = arith.addf %247, %250 : vector<8x128xf32>
    %c0_8 = arith.constant 0 : index
    %c0_9 = arith.constant 0 : index
    %252 = vector.load %arg2[%c0_8, %c0_9] : memref<8x128xf32, #tpu.memory_space<vmem>>, vector<8x128xf32>
    tpu.vector_store %arg2[%c0_8, %c0_9], %251 {strides = array<i32>} : memref<8x128xf32, #tpu.memory_space<vmem>>, vector<8x128xf32>,
    return
  }
}

</mosaic_0001>

<llo_original>
// kernel: run.1
$region0: #{run.1}
  #allocation0 [shape = 'u32[]', space=smem, size = 0x4, offset = 0x4, fixed_abs, tag = 'smem constant byte address 0x4 - core index']
  #allocation1 [shape = 'u32[144,128]{1,0:T(1,128)}', space=vmem, size = 0x12000, scoped, tag = 'internal scratch']
  %s0 = inlined_call_operand.vmem [shape: f32[8,128], index: 0, kind: input, shape index: {}]
  %s1 = inlined_call_operand.hbm [shape: f32[3,8,128], index: 1, kind: input, shape index: {}]
  %s2 = inlined_call_operand.hbm [shape: f32[8,128], index: 2, kind: output, shape index: {}]
  %s3 = sld [smem:[#allocation0]]
  $region22: #{run.1} parent=0
    _
  %s5 = ssub.s32 1, %s3
  %s6 = scalar_select 0, %s5, %s3
  $region1: #{run.1} parent=0
    #allocation2 [shape = 'u8[12288]{0}', space=vmem, size = 0x3000, scoped, tag = 'input window, operand 1, single buffered']
    #allocation3 [shape = 's32[1]{0}', space=sflag, size = 0x4, scoped, tag = 'scoped memory for run.1']
    #allocation4 [shape = 's32[1]{0}', space=sflag, size = 0x4, scoped, tag = 'scoped memory for run.1']
    #allocation5 [shape = 'u8[4096]{0}', space=vmem, size = 0x1000, scoped, tag = 'output window, operand 0, single buffered']
    %7 = vsyncpa [#allocation3], 0
    %8 = vsyncpa [#allocation4], 0
    // Predicated region
    $region2: #{run.1} parent=1 // pred_check
      _
    $region3: #{run.1} parent=1 // pred_check_branch
      %10 = sbr.rel (0) target = $region5
    $region4: #{run.1} parent=1 // pred_region
      _
    $region5: #{run.1} parent=1 // pred_fallthru
      _
    // Predicated region
    $region6: #{run.1} parent=1 // pred_check
      _
    $region7: #{run.1} parent=1 // pred_check_branch
      %12 = sbr.rel (0) target = $region9
    $region8: #{run.1} parent=1 // pred_region
      %s14 = ssub.s32 384, 384
      %15 = vsyncadd [#allocation3], %s14
      %s16 = sshll.u32 [#allocation2], 4
      %s17 = int_to_ptr.vmem [resolvable:$true] %s16
      %22 = dma.hbm_to_vmem [thread:$0]  %s1, 384, %s17, [#allocation3], 128, 128, 8
    $region9: #{run.1} parent=1 // pred_fallthru
      _
    // Predicated region
    $region10: #{run.1} parent=1 // pred_check
      _
    $region11: #{run.1} parent=1 // pred_check_branch
      %24 = sbr.rel (0) target = $region13
    $region12: #{run.1} parent=1 // pred_region
      %25 = dma.done [#allocation3], 384
    $region13: #{run.1} parent=1 // pred_fallthru
      _
    %v26 = vld [vmem:[#allocation2] sm:$0xff]
    %s27 = scalar_lea.vmem [#allocation2], 8
    %v28 = vld [vmem:[%s27] sm:$0xff]
    %s29 = scalar_lea.vmem [#allocation2], 16
    %v30 = vld [vmem:[%s29] sm:$0xff]
    %v31 = vlaneseq
    %v32 = vshrl.u32 %v31, 7
    %v33 = vsub.s32 0, %v32
    %v34 = vrot.slane %v26, %v33
    %v35 = vlaneseq
    %v36 = vshrl.u32 %v35, 7
    %v37 = vsub.s32 1, %v36
    %v38 = vrot.slane %v26, %v37
    %v39 = vlaneseq
    %v40 = vshrl.u32 %v39, 7
    %v41 = vsub.s32 2, %v40
    %v42 = vrot.slane %v26, %v41
    %v43 = vlaneseq
    %v44 = vshrl.u32 %v43, 7
    %v45 = vsub.s32 3, %v44
    %v46 = vrot.slane %v26, %v45
    %v47 = vlaneseq
    %v48 = vshrl.u32 %v47, 7
    %v49 = vsub.s32 4, %v48
    %v50 = vrot.slane %v26, %v49
    %v51 = vlaneseq
    %v52 = vshrl.u32 %v51, 7
    %v53 = vsub.s32 0, %v52
    %v54 = vrot.slane %v28, %v53
    %v55 = vlaneseq
    %v56 = vshrl.u32 %v55, 7
    %v57 = vsub.s32 1, %v56
    %v58 = vrot.slane %v28, %v57
    %v59 = vlaneseq
    %v60 = vshrl.u32 %v59, 7
    %v61 = vsub.s32 2, %v60
    %v62 = vrot.slane %v28, %v61
    %v63 = vlaneseq
    %v64 = vshrl.u32 %v63, 7
    %v65 = vsub.s32 3, %v64
    %v66 = vrot.slane %v28, %v65
    %v67 = vlaneseq
    %v68 = vshrl.u32 %v67, 7
    %v69 = vsub.s32 4, %v68
    %v70 = vrot.slane %v28, %v69
    %v71 = vlaneseq
    %v72 = vshrl.u32 %v71, 7
    %v73 = vsub.s32 0, %v72
    %v74 = vrot.slane %v30, %v73
    %v75 = vlaneseq
    %v76 = vshrl.u32 %v75, 7
    %v77 = vsub.s32 1, %v76
    %v78 = vrot.slane %v30, %v77
    %v79 = vlaneseq
    %v80 = vshrl.u32 %v79, 7
    %v81 = vsub.s32 2, %v80
    %v82 = vrot.slane %v30, %v81
    %v83 = vlaneseq
    %v84 = vshrl.u32 %v83, 7
    %v85 = vsub.s32 3, %v84
    %v86 = vrot.slane %v30, %v85
    %v87 = vlaneseq
    %v88 = vshrl.u32 %v87, 7
    %v89 = vsub.s32 4, %v88
    %v90 = vrot.slane %v30, %v89
    %v91 = vld [vmem:[%s0] sm:$0xff]
    %93 = vset.pattern.permute.xlu0 0
    %94 = vperm.xlu0 %93, %v91
    %v95 = vpop.permute.xlu0 %94
    %v97 = vmul.f32 %v95, %v34
    %98 = vset.pattern.permute.xlu0 1
    %99 = vperm.xlu0 %98, %v91
    %v100 = vpop.permute.xlu0 %99
    %v102 = vmul.f32 %v100, %v38
    %103 = vset.pattern.permute.xlu0 2
    %104 = vperm.xlu0 %103, %v91
    %v105 = vpop.permute.xlu0 %104
    %v107 = vmul.f32 %v105, %v42
    %108 = vset.pattern.permute.xlu0 3
    %109 = vperm.xlu0 %108, %v91
    %v110 = vpop.permute.xlu0 %109
    %v112 = vmul.f32 %v110, %v46
    %113 = vset.pattern.permute.xlu0 4
    %114 = vperm.xlu0 %113, %v91
    %v115 = vpop.permute.xlu0 %114
    %v117 = vmul.f32 %v115, %v50
    %v118 = vadd.f32 %v74, %v117
    %v119 = vadd.f32 %v97, %v102
    %v120 = vadd.f32 %v107, %v112
    %v121 = vadd.f32 %v119, %v120
    %v122 = vadd.f32 %v118, %v121
    %124 = vset.pattern.permute.xlu0 0
    %125 = vperm.xlu0 %124, %v122
    %v126 = vpop.permute.xlu0 %125
    %v128 = vmul.f32 %v126, %v54
    %129 = vset.pattern.permute.xlu0 1
    %130 = vperm.xlu0 %129, %v122
    %v131 = vpop.permute.xlu0 %130
    %v133 = vmul.f32 %v131, %v58
    %134 = vset.pattern.permute.xlu0 2
    %135 = vperm.xlu0 %134, %v122
    %v136 = vpop.permute.xlu0 %135
    %v138 = vmul.f32 %v136, %v62
    %139 = vset.pattern.permute.xlu0 3
    %140 = vperm.xlu0 %139, %v122
    %v141 = vpop.permute.xlu0 %140
    %v143 = vmul.f32 %v141, %v66
    %144 = vset.pattern.permute.xlu0 4
    %145 = vperm.xlu0 %144, %v122
    %v146 = vpop.permute.xlu0 %145
    %v148 = vmul.f32 %v146, %v70
    %v149 = vadd.f32 %v86, %v148
    %v150 = vadd.f32 %v128, %v133
    %v151 = vadd.f32 %v138, %v143
    %v152 = vadd.f32 %v150, %v151
    %v153 = vadd.f32 %v149, %v152
    %155 = vset.pattern.permute.xlu0 0
    %156 = vperm.xlu0 %155, %v153
    %v157 = vpop.permute.xlu0 %156
    %v159 = vmul.f32 %v157, %v54
    %160 = vset.pattern.permute.xlu0 1
    %161 = vperm.xlu0 %160, %v153
    %v162 = vpop.permute.xlu0 %161
    %v164 = vmul.f32 %v162, %v58
    %165 = vset.pattern.permute.xlu0 2
    %166 = vperm.xlu0 %165, %v153
    %v167 = vpop.permute.xlu0 %166
    %v169 = vmul.f32 %v167, %v62
    %170 = vset.pattern.permute.xlu0 3
    %171 = vperm.xlu0 %170, %v153
    %v172 = vpop.permute.xlu0 %171
    %v174 = vmul.f32 %v172, %v66
    %175 = vset.pattern.permute.xlu0 4
    %176 = vperm.xlu0 %175, %v153
    %v177 = vpop.permute.xlu0 %176
    %v179 = vmul.f32 %v177, %v70
    %v180 = vadd.f32 %v86, %v179
    %v181 = vadd.f32 %v159, %v164
    %v182 = vadd.f32 %v169, %v174
    %v183 = vadd.f32 %v181, %v182
    %v184 = vadd.f32 %v180, %v183
    %186 = vset.pattern.permute.xlu0 0
    %187 = vperm.xlu0 %186, %v184
    %v188 = vpop.permute.xlu0 %187
    %v190 = vmul.f32 %v188, %v34
    %191 = vset.pattern.permute.xlu0 1
    %192 = vperm.xlu0 %191, %v184
    %v193 = vpop.permute.xlu0 %192
    %v195 = vmul.f32 %v193, %v38
    %196 = vset.pattern.permute.xlu0 2
    %197 = vperm.xlu0 %196, %v184
    %v198 = vpop.permute.xlu0 %197
    %v200 = vmul.f32 %v198, %v42
    %201 = vset.pattern.permute.xlu0 3
    %202 = vperm.xlu0 %201, %v184
    %v203 = vpop.permute.xlu0 %202
    %v205 = vmul.f32 %v203, %v46
    %206 = vset.pattern.permute.xlu0 4
    %207 = vperm.xlu0 %206, %v184
    %v208 = vpop.permute.xlu0 %207
    %v210 = vmul.f32 %v208, %v50
    %v211 = vadd.f32 %v74, %v210
    %v212 = vadd.f32 %v190, %v195
    %v213 = vadd.f32 %v200, %v205
    %v214 = vadd.f32 %v212, %v213
    %v215 = vadd.f32 %v211, %v214
    %217 = vset.pattern.permute.xlu0 0
    %218 = vperm.xlu0 %217, %v215
    %v219 = vpop.permute.xlu0 %218
    %v221 = vmul.f32 %v219, %v54
    %222 = vset.pattern.permute.xlu0 1
    %223 = vperm.xlu0 %222, %v215
    %v224 = vpop.permute.xlu0 %223
    %v226 = vmul.f32 %v224, %v58
    %227 = vset.pattern.permute.xlu0 2
    %228 = vperm.xlu0 %227, %v215
    %v229 = vpop.permute.xlu0 %228
    %v231 = vmul.f32 %v229, %v62
    %232 = vset.pattern.permute.xlu0 3
    %233 = vperm.xlu0 %232, %v215
    %v234 = vpop.permute.xlu0 %233
    %v236 = vmul.f32 %v234, %v66
    %237 = vset.pattern.permute.xlu0 4
    %238 = vperm.xlu0 %237, %v215
    %v239 = vpop.permute.xlu0 %238
    %v241 = vmul.f32 %v239, %v70
    %v242 = vadd.f32 %v86, %v241
    %v243 = vadd.f32 %v221, %v226
    %v244 = vadd.f32 %v231, %v236
    %v245 = vadd.f32 %v243, %v244
    %v246 = vadd.f32 %v242, %v245
    %248 = vset.pattern.permute.xlu0 0
    %249 = vperm.xlu0 %248, %v246
    %v250 = vpop.permute.xlu0 %249
    %v252 = vmul.f32 %v250, %v54
    %253 = vset.pattern.permute.xlu0 1
    %254 = vperm.xlu0 %253, %v246
    %v255 = vpop.permute.xlu0 %254
    %v257 = vmul.f32 %v255, %v58
    %258 = vset.pattern.permute.xlu0 2
    %259 = vperm.xlu0 %258, %v246
    %v260 = vpop.permute.xlu0 %259
    %v262 = vmul.f32 %v260, %v62
    %263 = vset.pattern.permute.xlu0 3
    %264 = vperm.xlu0 %263, %v246
    %v265 = vpop.permute.xlu0 %264
    %v267 = vmul.f32 %v265, %v66
    %268 = vset.pattern.permute.xlu0 4
    %269 = vperm.xlu0 %268, %v246
    %v270 = vpop.permute.xlu0 %269
    %v272 = vmul.f32 %v270, %v70
    %v273 = vadd.f32 %v90, %v272
    %v274 = vadd.f32 %v252, %v257
    %v275 = vadd.f32 %v262, %v267
    %v276 = vadd.f32 %v274, %v275
    %v277 = vadd.f32 %v273, %v276
    %279 = vset.pattern.permute.xlu0 0
    %280 = vperm.xlu0 %279, %v277
    %v281 = vpop.permute.xlu0 %280
    %v283 = vmul.f32 %v281, %v34
    %284 = vset.pattern.permute.xlu0 1
    %285 = vperm.xlu0 %284, %v277
    %v286 = vpop.permute.xlu0 %285
    %v288 = vmul.f32 %v286, %v38
    %289 = vset.pattern.permute.xlu0 2
    %290 = vperm.xlu0 %289, %v277
    %v291 = vpop.permute.xlu0 %290
    %v293 = vmul.f32 %v291, %v42
    %294 = vset.pattern.permute.xlu0 3
    %295 = vperm.xlu0 %294, %v277
    %v296 = vpop.permute.xlu0 %295
    %v298 = vmul.f32 %v296, %v46
    %299 = vset.pattern.permute.xlu0 4
    %300 = vperm.xlu0 %299, %v277
    %v301 = vpop.permute.xlu0 %300
    %v303 = vmul.f32 %v301, %v50
    %v304 = vadd.f32 %v78, %v303
    %v305 = vadd.f32 %v283, %v288
    %v306 = vadd.f32 %v293, %v298
    %v307 = vadd.f32 %v305, %v306
    %v308 = vadd.f32 %v304, %v307
    %310 = vset.pattern.permute.xlu0 0
    %311 = vperm.xlu0 %310, %v308
    %v312 = vpop.permute.xlu0 %311
    %v314 = vmul.f32 %v312, %v54
    %315 = vset.pattern.permute.xlu0 1
    %316 = vperm.xlu0 %315, %v308
    %v317 = vpop.permute.xlu0 %316
    %v319 = vmul.f32 %v317, %v58
    %320 = vset.pattern.permute.xlu0 2
    %321 = vperm.xlu0 %320, %v308
    %v322 = vpop.permute.xlu0 %321
    %v324 = vmul.f32 %v322, %v62
    %325 = vset.pattern.permute.xlu0 3
    %326 = vperm.xlu0 %325, %v308
    %v327 = vpop.permute.xlu0 %326
    %v329 = vmul.f32 %v327, %v66
    %330 = vset.pattern.permute.xlu0 4
    %331 = vperm.xlu0 %330, %v308
    %v332 = vpop.permute.xlu0 %331
    %v334 = vmul.f32 %v332, %v70
    %v335 = vadd.f32 %v90, %v334
    %v336 = vadd.f32 %v314, %v319
    %v337 = vadd.f32 %v324, %v329
    %v338 = vadd.f32 %v336, %v337
    %v339 = vadd.f32 %v335, %v338
    %341 = vset.pattern.permute.xlu0 0
    %342 = vperm.xlu0 %341, %v339
    %v343 = vpop.permute.xlu0 %342
    %v345 = vmul.f32 %v343, %v54
    %346 = vset.pattern.permute.xlu0 1
    %347 = vperm.xlu0 %346, %v339
    %v348 = vpop.permute.xlu0 %347
    %v350 = vmul.f32 %v348, %v58
    %351 = vset.pattern.permute.xlu0 2
    %352 = vperm.xlu0 %351, %v339
    %v353 = vpop.permute.xlu0 %352
    %v355 = vmul.f32 %v353, %v62
    %356 = vset.pattern.permute.xlu0 3
    %357 = vperm.xlu0 %356, %v339
    %v358 = vpop.permute.xlu0 %357
    %v360 = vmul.f32 %v358, %v66
    %361 = vset.pattern.permute.xlu0 4
    %362 = vperm.xlu0 %361, %v339
    %v363 = vpop.permute.xlu0 %362
    %v365 = vmul.f32 %v363, %v70
    %v366 = vadd.f32 %v90, %v365
    %v367 = vadd.f32 %v345, %v350
    %v368 = vadd.f32 %v355, %v360
    %v369 = vadd.f32 %v367, %v368
    %v370 = vadd.f32 %v366, %v369
    %372 = vset.pattern.permute.xlu0 0
    %373 = vperm.xlu0 %372, %v370
    %v374 = vpop.permute.xlu0 %373
    %v376 = vmul.f32 %v374, %v34
    %377 = vset.pattern.permute.xlu0 1
    %378 = vperm.xlu0 %377, %v370
    %v379 = vpop.permute.xlu0 %378
    %v381 = vmul.f32 %v379, %v38
    %382 = vset.pattern.permute.xlu0 2
    %383 = vperm.xlu0 %382, %v370
    %v384 = vpop.permute.xlu0 %383
    %v386 = vmul.f32 %v384, %v42
    %387 = vset.pattern.permute.xlu0 3
    %388 = vperm.xlu0 %387, %v370
    %v389 = vpop.permute.xlu0 %388
    %v391 = vmul.f32 %v389, %v46
    %392 = vset.pattern.permute.xlu0 4
    %393 = vperm.xlu0 %392, %v370
    %v394 = vpop.permute.xlu0 %393
    %v396 = vmul.f32 %v394, %v50
    %v397 = vadd.f32 %v82, %v396
    %v398 = vadd.f32 %v376, %v381
    %v399 = vadd.f32 %v386, %v391
    %v400 = vadd.f32 %v398, %v399
    %v401 = vadd.f32 %v397, %v400
    %402 = vst [vmem:[#allocation5] sm:$0xff] %v401
    // Predicated region
    $region14: #{run.1} parent=1 // pred_check
      _
    $region15: #{run.1} parent=1 // pred_check_branch
      %404 = sbr.rel (0) target = $region17
    $region16: #{run.1} parent=1 // pred_region
      %s406 = ssub.s32 128, 128
      %407 = vsyncadd [#allocation4], %s406
      %s409 = sshll.u32 [#allocation5], 4
      %s410 = int_to_ptr.vmem [resolvable:$true] %s409
      %412 = dma.vmem_to_hbm [thread:$0]  %s410, 128, %s2, [#allocation4]
    $region17: #{run.1} parent=1 // pred_fallthru
      _
    // Predicated region
    $region18: #{run.1} parent=1 // pred_check
      _
    $region19: #{run.1} parent=1 // pred_check_branch
      %414 = sbr.rel (0) target = $region21
    $region20: #{run.1} parent=1 // pred_region
      %415 = dma.done [#allocation4], 128
    $region21: #{run.1} parent=1 // pred_fallthru
      _
    %416 = vsyncpa [#allocation3], 1
    %417 = vsyncpa [#allocation4], 1

</llo_original>
